<compile_context>
chip_gen: v7x
topology: tpu7x:2x2x1
jax: 0.10.0
libtpu: 0.0.40
codegen_flags: <defaults>
</compile_context>

<pallas_src>
import functools

import jax
import jax.numpy as jnp
from jax.experimental import pallas as pl
from jax.experimental.pallas import tpu as pltpu


def _round_up(n: int, m: int) -> int:
    return ((n + m - 1) // m) * m


def _mlp_kernel(*refs, has_static: bool, apply_sigmoid: bool, transposed_out: bool):
    if has_static:
        x_ref, s_ref, w1x_ref, w1s_ref, b1_ref, w2_ref, b2_ref, o_ref = refs
    else:
        x_ref, w1x_ref, b1_ref, w2_ref, b2_ref, o_ref = refs
        s_ref = w1s_ref = None

    # Layer 1: cat([x, static], 1) @ W1 == x @ W1[:Dx] + static @ W1[Dx:]
    h = jnp.dot(x_ref[...], w1x_ref[...], preferred_element_type=jnp.float32)
    if has_static:
        h = h + jnp.dot(s_ref[...], w1s_ref[...], preferred_element_type=jnp.float32)
    h = h + b1_ref[...]
    h = jnp.maximum(h, 0.0)                                    # ReLU

    if transposed_out:
        # w2_ref holds W2^T with shape (O, H). Contract on the last dims
        # (rhs-transposed matmul, natively supported on the MXU) so the result
        # is already (O, bm): lane-dense in batch -> unmasked vector stores.
        y = jax.lax.dot_general(
            w2_ref[...], h.astype(w2_ref.dtype),
            dimension_numbers=(((1,), (1,)), ((), ())),
            preferred_element_type=jnp.float32)
        y = y + b2_ref[...]                                    # (O, 1) bcast over lanes
    else:
        y = jnp.dot(h.astype(w2_ref.dtype), w2_ref[...],
                    preferred_element_type=jnp.float32)
        y = y + b2_ref[...]                                    # (1, O)

    if apply_sigmoid:                                          # output_dim == 1
        # exp and approx reciprocal both ride the EUP slot; VALU stays free.
        y = pl.reciprocal(1.0 + jnp.exp(-y), approx=True)

    o_ref[...] = y.astype(o_ref.dtype)


def mlp_forward(x, static, w1, b1, w2, b2, *, bm: int = 512,
                vmem_budget_bytes: int = 24 * 1024 * 1024):
    """Pallas equivalent of MLP.forward (use_batch_norm=False).

    x:      (B, Dx)            time-varying features
    static: (B, Ds) or None    static features (concatenated on feature axis)
    w1:     (Dx + Ds, H)       input_fc weight (math layout: in @ w1)
    b1:     (H,)
    w2:     (H, O)             output_fc weight
    b2:     (O,)
    returns (B, O); sigmoid applied iff O == 1 (matches the PyTorch module).
    """
    # TODO(synk): BatchNorm1d (training-mode batch statistics) path not
    # implemented; only the default use_batch_norm=False forward is covered.
    b, dx = x.shape
    din, h_dim = w1.shape
    h2, o_dim = w2.shape
    assert h2 == h_dim
    has_static = static is not None
    ds = static.shape[1] if has_static else 0
    assert dx + ds == din

    apply_sigmoid = (o_dim == 1)
    transposed_out = (o_dim < 128)          # lane-dense output for small heads

    in_itemsize = jnp.dtype(x.dtype).itemsize
    w_itemsize = jnp.dtype(w1.dtype).itemsize
    sub_align = max(8, 32 // in_itemsize)   # 8 for f32, 16 for bf16, 32 for i8/fp8

    # ---- batch-tile selection --------------------------------------------
    # Big tiles amortize the ~0.35 us per-grid-step overhead; cap by a VMEM
    # budget that is safe on v7x (64 MiB physical / 32 MiB scoped default).
    per_row_bytes = (2 * (dx + ds) * in_itemsize           # double-buffered inputs
                     + 2 * max(o_dim, 8) * in_itemsize     # double-buffered output
                     + 4 * (h_dim + max(o_dim, 8)))        # f32 intermediates
    weight_bytes = 2 * w_itemsize * (din * h_dim + h_dim + h_dim * o_dim + o_dim)
    bm_cap = max(128, (vmem_budget_bytes - weight_bytes) // max(per_row_bytes, 1))
    bm_target = max(128, (min(bm, bm_cap) // 128) * 128)

    small_pad = _round_up(b, sub_align)
    if small_pad <= bm_target:
        # Single grid step covering the (aligned) full batch.
        bm_eff = small_pad
        b_pad = small_pad
    else:
        # >= 2 steps so both v7x TensorCores get work; tiles are multiples of
        # 128 so they are legal on both the sublane (inputs, batch-major) and
        # lane (transposed output, batch-minor) axes.
        half = _round_up((small_pad + 1) // 2, 128)
        bm_eff = min(bm_target, half)
        b_pad = _round_up(b, bm_eff)
    grid = (b_pad // bm_eff,)

    if b_pad != b:
        x = jnp.pad(x, ((0, b_pad - b), (0, 0)))
        if has_static:
            static = jnp.pad(static, ((0, b_pad - b), (0, 0)))

    b1_k = b1.reshape(1, h_dim)
    if transposed_out:
        w2_k = w2.T                           # (O, H)
        b2_k = b2.reshape(o_dim, 1)
        out_arr_shape = (o_dim, b_pad)        # batch on the lane axis
        out_spec = pl.BlockSpec((o_dim, bm_eff), lambda i: (0, i))
    else:
        w2_k = w2
        b2_k = b2.reshape(1, o_dim)
        out_arr_shape = (b_pad, o_dim)
        out_spec = pl.BlockSpec((bm_eff, o_dim), lambda i: (i, 0))

    def batch_spec(cols):
        return pl.BlockSpec((bm_eff, cols), lambda i: (i, 0))

    def rep_spec(rows, cols):
        # Constant index_map: fetched once, reused across all grid steps.
        return pl.BlockSpec((rows, cols), lambda i: (0, 0))

    kernel = functools.partial(_mlp_kernel, has_static=has_static,
                               apply_sigmoid=apply_sigmoid,
                               transposed_out=transposed_out)

    if has_static:
        w1x, w1s = w1[:dx], w1[dx:]
        args = (x, static, w1x, w1s, b1_k, w2_k, b2_k)
        in_specs = [batch_spec(dx), batch_spec(ds),
                    rep_spec(dx, h_dim), rep_spec(ds, h_dim), rep_spec(1, h_dim),
                    rep_spec(*w2_k.shape), rep_spec(*b2_k.shape)]
    else:
        args = (x, w1, b1_k, w2_k, b2_k)
        in_specs = [batch_spec(dx),
                    rep_spec(din, h_dim), rep_spec(1, h_dim),
                    rep_spec(*w2_k.shape), rep_spec(*b2_k.shape)]

    cost = pl.CostEstimate(
        flops=2 * b_pad * (din * h_dim + h_dim * o_dim),
        transcendentals=(b_pad * o_dim) if apply_sigmoid else 0,
        bytes_accessed=(b_pad * (dx + ds + o_dim) * in_itemsize
                        + (din * h_dim + h_dim + h_dim * o_dim + o_dim) * w_itemsize))

    out = pl.pallas_call(
        kernel,
        out_shape=jax.ShapeDtypeStruct(out_arr_shape, x.dtype),
        grid_spec=pltpu.PrefetchScalarGridSpec(
            num_scalar_prefetch=0,
            grid=grid,
            in_specs=in_specs,
            out_specs=out_spec,
        ),
        compiler_params=pltpu.CompilerParams(
            dimension_semantics=("parallel",),
            vmem_limit_bytes=32 * 1024 * 1024,
        ),
        cost_estimate=cost,
    )(*args)

    if transposed_out:
        out = out.T                           # cheap wrapper-side layout plumbing
    return out[:b]


if __name__ == "__main__":
    key = jax.random.PRNGKey(0)
    ks = jax.random.split(key, 9)

    def ref_forward(x, static, w1, b1, w2, b2):
        inp = x if static is None else jnp.concatenate([x, static], axis=1)
        hidden = jnp.maximum(inp @ w1 + b1, 0.0)
        y = hidden @ w2 + b2
        if w2.shape[1] == 1:
            y = jax.nn.sigmoid(y)
        return y

    # Shapes consistent with the module: batch=8, x feats=16, static feats=4,
    # hidden=32, output=1.
    B, DX, DS, H, O = 8, 16, 4, 32, 1
    x = jax.random.normal(ks[0], (B, DX), dtype=jnp.float32)
    s = jax.random.normal(ks[1], (B, DS), dtype=jnp.float32)
    w1 = jax.random.normal(ks[2], (DX + DS, H), dtype=jnp.float32) * 0.1
    b1 = jax.random.normal(ks[3], (H,), dtype=jnp.float32) * 0.1
    w2 = jax.random.normal(ks[4], (H, O), dtype=jnp.float32) * 0.1
    b2 = jax.random.normal(ks[5], (O,), dtype=jnp.float32) * 0.1

    # Case 1: small batch, with static features (single grid step).
    out = jax.block_until_ready(mlp_forward(x, s, w1, b1, w2, b2))
    ref = ref_forward(x, s, w1, b1, w2, b2)
    assert out.shape == (B, O) and out.dtype == x.dtype
    assert jnp.allclose(out, ref, atol=2e-3), float(jnp.max(jnp.abs(out - ref)))

    # Case 2: batch large enough to exercise padding + multi-step tiling.
    B2 = 640
    x2 = jax.random.normal(ks[6], (B2, DX), dtype=jnp.float32)
    s2 = jax.random.normal(ks[7], (B2, DS), dtype=jnp.float32)
    out2 = jax.block_until_ready(mlp_forward(x2, s2, w1, b1, w2, b2))
    ref2 = ref_forward(x2, s2, w1, b1, w2, b2)
    assert out2.shape == (B2, O)
    assert jnp.allclose(out2, ref2, atol=2e-3), float(jnp.max(jnp.abs(out2 - ref2)))

    # Case 3: static=None path.
    w1n = jax.random.normal(ks[8], (DX, H), dtype=jnp.float32) * 0.1
    out3 = jax.block_until_ready(mlp_forward(x, None, w1n, b1, w2, b2))
    ref3 = ref_forward(x, None, w1n, b1, w2, b2)
    assert jnp.allclose(out3, ref3, atol=2e-3), float(jnp.max(jnp.abs(out3 - ref3)))

    print("KERNEL_OK")
</pallas_src>

<mosaic_0001>
module attributes {stable_mosaic.version = 11 : i64} {
  func.func @_mlp_kernel(%arg0: i32, %arg1: memref<8x16xf32, #tpu.memory_space<vmem>>, %arg2: memref<8x4xf32, #tpu.memory_space<vmem>>, %arg3: memref<16x32xf32, #tpu.memory_space<vmem>>, %arg4: memref<4x32xf32, #tpu.memory_space<vmem>>, %arg5: memref<1x32xf32, #tpu.memory_space<vmem>>, %arg6: memref<1x32xf32, #tpu.memory_space<vmem>>, %arg7: memref<1x1xf32, #tpu.memory_space<vmem>>, %arg8: memref<1x8xf32, #tpu.memory_space<vmem>>) attributes {dimension_semantics = [#tpu.dimension_semantics<parallel>], iteration_bounds = array<i64: 1>, scalar_prefetch = 0 : i64, scratch_operands = 0 : i64, tpu.core_type = #tpu.core_type<tc>, window_params = [{transform_indices = @transform_0, window_bounds = array<i64: 8, 16>}, {transform_indices = @transform_1, window_bounds = array<i64: 8, 4>}, {pipeline_mode = #tpu.pipeline_mode<synchronous>, transform_indices = @transform_2, window_bounds = array<i64: 16, 32>}, {pipeline_mode = #tpu.pipeline_mode<synchronous>, transform_indices = @transform_3, window_bounds = array<i64: 4, 32>}, {pipeline_mode = #tpu.pipeline_mode<synchronous>, transform_indices = @transform_4, window_bounds = array<i64: 1, 32>}, {pipeline_mode = #tpu.pipeline_mode<synchronous>, transform_indices = @transform_5, window_bounds = array<i64: 1, 32>}, {pipeline_mode = #tpu.pipeline_mode<synchronous>, transform_indices = @transform_6, window_bounds = array<i64: 1, 1>}, {transform_indices = @transform_7, window_bounds = array<i64: 1, 8>}]} {
    %c0 = arith.constant 0 : index
    %c0_0 = arith.constant 0 : index
    %0 = vector.load %arg1[%c0, %c0_0] : memref<8x16xf32, #tpu.memory_space<vmem>>, vector<8x16xf32>
    %c0_1 = arith.constant 0 : index
    %c0_2 = arith.constant 0 : index
    %1 = vector.load %arg3[%c0_1, %c0_2] : memref<16x32xf32, #tpu.memory_space<vmem>>, vector<16x32xf32>
    %cst = arith.constant dense<0.000000e+00> : vector<8x32xf32>
    %2 = tpu.matmul %0, %1, %cst {dimension_numbers = #tpu.dot_dimension_numbers<[1], [0], [0], [1], [0, 0, 1, 1], [], []>} : vector<8x16xf32>, vector<16x32xf32>, vector<8x32xf32> -> vector<8x32xf32>
    %c0_3 = arith.constant 0 : index
    %c0_4 = arith.constant 0 : index
    %3 = vector.load %arg2[%c0_3, %c0_4] : memref<8x4xf32, #tpu.memory_space<vmem>>, vector<8x4xf32>
    %c0_5 = arith.constant 0 : index
    %c0_6 = arith.constant 0 : index
    %4 = vector.load %arg4[%c0_5, %c0_6] : memref<4x32xf32, #tpu.memory_space<vmem>>, vector<4x32xf32>
    %cst_7 = arith.constant dense<0.000000e+00> : vector<8x32xf32>
    %5 = tpu.matmul %3, %4, %cst_7 {dimension_numbers = #tpu.dot_dimension_numbers<[1], [0], [0], [1], [0, 0, 1, 1], [], []>} : vector<8x4xf32>, vector<4x32xf32>, vector<8x32xf32> -> vector<8x32xf32>
    %6 = arith.addf %2, %5 : vector<8x32xf32>
    %c0_8 = arith.constant 0 : index
    %c0_9 = arith.constant 0 : index
    %7 = vector.load %arg5[%c0_8, %c0_9] : memref<1x32xf32, #tpu.memory_space<vmem>>, vector<1x32xf32>
    %8 = vector.broadcast %7 : vector<1x32xf32> to vector<8x32xf32>
    %9 = arith.addf %6, %8 : vector<8x32xf32>
    %cst_10 = arith.constant 0.000000e+00 : f32
    %10 = vector.broadcast %cst_10 : f32 to vector<8x32xf32>
    %11 = arith.maximumf %9, %10 : vector<8x32xf32>
    %c0_11 = arith.constant 0 : index
    %c0_12 = arith.constant 0 : index
    %12 = vector.load %arg6[%c0_11, %c0_12] : memref<1x32xf32, #tpu.memory_space<vmem>>, vector<1x32xf32>
    %cst_13 = arith.constant dense<0.000000e+00> : vector<1x8xf32>
    %13 = tpu.matmul %12, %11, %cst_13 {dimension_numbers = #tpu.dot_dimension_numbers<[1], [1], [0], [0], [0, 0, 1, 0], [], []>} : vector<1x32xf32>, vector<8x32xf32>, vector<1x8xf32> -> vector<1x8xf32>
    %c0_14 = arith.constant 0 : index
    %c0_15 = arith.constant 0 : index
    %14 = vector.load %arg7[%c0_14, %c0_15] : memref<1x1xf32, #tpu.memory_space<vmem>>, vector<1x1xf32>
    %15 = vector.broadcast %14 : vector<1x1xf32> to vector<1x8xf32>
    %16 = arith.addf %13, %15 : vector<1x8xf32>
    %cst_16 = arith.constant 0.000000e+00 : f32
    %17 = vector.broadcast %cst_16 : f32 to vector<1x8xf32>
    %18 = arith.subf %17, %16 : vector<1x8xf32>
    %19 = math.exp %18 : vector<1x8xf32>
    %cst_17 = arith.constant 1.000000e+00 : f32
    %20 = vector.broadcast %cst_17 : f32 to vector<1x8xf32>
    %21 = arith.addf %20, %19 : vector<1x8xf32>
    %22 = tpu.reciprocal %21 {approx = true} : vector<1x8xf32> -> vector<1x8xf32>
    %c0_18 = arith.constant 0 : index
    %c0_19 = arith.constant 0 : index
    %23 = vector.load %arg8[%c0_18, %c0_19] : memref<1x8xf32, #tpu.memory_space<vmem>>, vector<1x8xf32>
    tpu.vector_store %arg8[%c0_18, %c0_19], %22 {strides = array<i32>} : memref<1x8xf32, #tpu.memory_space<vmem>>, vector<1x8xf32>,
    return
  }
  func.func @transform_0(%arg0: i32) -> (i32, i32) {
    %c0_i32 = arith.constant 0 : i32
    %c0_i32_0 = arith.constant 0 : i32
    return %arg0, %c0_i32 : i32, i32
  }
  func.func @transform_1(%arg0: i32) -> (i32, i32) {
    %c0_i32 = arith.constant 0 : i32
    %c0_i32_0 = arith.constant 0 : i32
    return %arg0, %c0_i32 : i32, i32
  }
  func.func @transform_2(%arg0: i32) -> (i32, i32) {
    %c0_i32 = arith.constant 0 : i32
    %c0_i32_0 = arith.constant 0 : i32
    %c0_i32_1 = arith.constant 0 : i32
    return %c0_i32, %c0_i32_0 : i32, i32
  }
  func.func @transform_3(%arg0: i32) -> (i32, i32) {
    %c0_i32 = arith.constant 0 : i32
    %c0_i32_0 = arith.constant 0 : i32
    %c0_i32_1 = arith.constant 0 : i32
    return %c0_i32, %c0_i32_0 : i32, i32
  }
  func.func @transform_4(%arg0: i32) -> (i32, i32) {
    %c0_i32 = arith.constant 0 : i32
    %c0_i32_0 = arith.constant 0 : i32
    %c0_i32_1 = arith.constant 0 : i32
    return %c0_i32, %c0_i32_0 : i32, i32
  }
  func.func @transform_5(%arg0: i32) -> (i32, i32) {
    %c0_i32 = arith.constant 0 : i32
    %c0_i32_0 = arith.constant 0 : i32
    %c0_i32_1 = arith.constant 0 : i32
    return %c0_i32, %c0_i32_0 : i32, i32
  }
  func.func @transform_6(%arg0: i32) -> (i32, i32) {
    %c0_i32 = arith.constant 0 : i32
    %c0_i32_0 = arith.constant 0 : i32
    %c0_i32_1 = arith.constant 0 : i32
    return %c0_i32, %c0_i32_0 : i32, i32
  }
  func.func @transform_7(%arg0: i32) -> (i32, i32) {
    %c0_i32 = arith.constant 0 : i32
    %c0_i32_0 = arith.constant 0 : i32
    return %c0_i32, %arg0 : i32, i32
  }
}

</mosaic_0001>

<llo_original>
// kernel: tpu_custom_call.1
$region0: #{tpu_custom_call.1}
  #allocation0 [shape = 'u32[]', space=smem, size = 0x4, offset = 0x4, fixed_abs, tag = 'smem constant byte address 0x4 - core index']
  #allocation1 [shape = 'u32[144,128]{1,0:T(1,128)}', space=vmem, size = 0x12000, scoped, tag = 'internal scratch']
  #allocation2 [shape = 'f32[1,1]{1,0:T(1,128)S(1)}', space=vmem, size = 0x200, scoped, tag = 'scoped memory for tpu_custom_call.1']
  %s0 = inlined_call_operand.hbm [shape: f32[8,16], index: 0, kind: input, shape index: {}]
  %s1 = inlined_call_operand.vmem [shape: f32[8,4], index: 1, kind: input, shape index: {}]
  %s2 = inlined_call_operand.vmem [shape: f32[16,32], index: 2, kind: input, shape index: {}]
  %s3 = inlined_call_operand.vmem [shape: f32[4,32], index: 3, kind: input, shape index: {}]
  %s4 = inlined_call_operand.vmem [shape: f32[1,32], index: 4, kind: input, shape index: {}]
  %s5 = inlined_call_operand.vmem [shape: f32[1,32], index: 5, kind: input, shape index: {}]
  %s6 = inlined_call_operand.<no memory space> [shape: f32[1,1], index: 6, kind: input, shape index: {}]
  %s7 = inlined_call_operand.hbm [shape: f32[1,8], index: 7, kind: output, shape index: {}]
  %s8 = sld [smem:[#allocation0]]
  $region42: #{tpu_custom_call.1} parent=0
    _
  %s10 = ssub.s32 1, %s8
  %s11 = scalar_select 0, %s10, %s8
  %v12 = vstv %s6
  %13 = vst [vmem:[#allocation2] sm:$0x1] %v12
  $region1: #{tpu_custom_call.1} parent=0
    #allocation3 [shape = 'u8[4096]{0}', space=vmem, size = 0x1000, scoped, tag = 'input window, operand 0, single buffered']
    #allocation4 [shape = 's32[1]{0}', space=sflag, size = 0x4, scoped, tag = 'scoped memory for tpu_custom_call.1']
    #allocation5 [shape = 's32[1]{0}', space=sflag, size = 0x4, scoped, tag = 'scoped memory for tpu_custom_call.1']
    #allocation6 [shape = 'u8[512]{0}', space=vmem, size = 0x400, scoped, tag = 'output window, operand 0, single buffered']
    %14 = vsyncpa [#allocation4], 0
    %15 = vsyncpa [#allocation5], 0
    // Predicated region
    $region2: #{tpu_custom_call.1} parent=1 // pred_check
      _
    $region3: #{tpu_custom_call.1} parent=1 // pred_check_branch
      %17 = sbr.rel (0) target = $region5
    $region4: #{tpu_custom_call.1} parent=1 // pred_region
      %s19 = ssub.s32 128, 128
      %20 = vsyncadd [#allocation4], %s19
      %s22 = sshll.u32 [#allocation3], 4
      %s23 = int_to_ptr.vmem [resolvable:$true] %s22
      %25 = dma.hbm_to_vmem [thread:$0]  %s0, 128, %s23, [#allocation4]
    $region5: #{tpu_custom_call.1} parent=1 // pred_fallthru
      _
    // Predicated region
    $region6: #{tpu_custom_call.1} parent=1 // pred_check
      _
    $region7: #{tpu_custom_call.1} parent=1 // pred_check_branch
      %27 = sbr.rel (0) target = $region9
    $region8: #{tpu_custom_call.1} parent=1 // pred_region
      _
    $region9: #{tpu_custom_call.1} parent=1 // pred_fallthru
      _
    // Predicated region
    $region10: #{tpu_custom_call.1} parent=1 // pred_check
      _
    $region11: #{tpu_custom_call.1} parent=1 // pred_check_branch
      %29 = sbr.rel (0) target = $region13
    $region12: #{tpu_custom_call.1} parent=1 // pred_region
      _
    $region13: #{tpu_custom_call.1} parent=1 // pred_fallthru
      _
    // Predicated region
    $region14: #{tpu_custom_call.1} parent=1 // pred_check
      _
    $region15: #{tpu_custom_call.1} parent=1 // pred_check_branch
      %31 = sbr.rel (0) target = $region17
    $region16: #{tpu_custom_call.1} parent=1 // pred_region
      _
    $region17: #{tpu_custom_call.1} parent=1 // pred_fallthru
      _
    // Predicated region
    $region18: #{tpu_custom_call.1} parent=1 // pred_check
      _
    $region19: #{tpu_custom_call.1} parent=1 // pred_check_branch
      %33 = sbr.rel (0) target = $region21
    $region20: #{tpu_custom_call.1} parent=1 // pred_region
      _
    $region21: #{tpu_custom_call.1} parent=1 // pred_fallthru
      _
    // Predicated region
    $region22: #{tpu_custom_call.1} parent=1 // pred_check
      _
    $region23: #{tpu_custom_call.1} parent=1 // pred_check_branch
      %35 = sbr.rel (0) target = $region25
    $region24: #{tpu_custom_call.1} parent=1 // pred_region
      _
    $region25: #{tpu_custom_call.1} parent=1 // pred_fallthru
      _
    // Predicated region
    $region26: #{tpu_custom_call.1} parent=1 // pred_check
      _
    $region27: #{tpu_custom_call.1} parent=1 // pred_check_branch
      %37 = sbr.rel (0) target = $region29
    $region28: #{tpu_custom_call.1} parent=1 // pred_region
      _
    $region29: #{tpu_custom_call.1} parent=1 // pred_fallthru
      _
    // Predicated region
    $region30: #{tpu_custom_call.1} parent=1 // pred_check
      _
    $region31: #{tpu_custom_call.1} parent=1 // pred_check_branch
      %39 = sbr.rel (0) target = $region33
    $region32: #{tpu_custom_call.1} parent=1 // pred_region
      %40 = dma.done [#allocation4], 128
    $region33: #{tpu_custom_call.1} parent=1 // pred_fallthru
      _
    %v41 = vld [vmem:[#allocation3] sm:$0xff]
    %v42 = vld [vmem:[%s2] sm:$0xff]
    %v43 = vld [vmem:[%s2 + $0x8] sm:$0xff]
    %v44 = vld [vmem:[%s1] sm:$0xff]
    %v45 = vld [vmem:[%s3] sm:$0xf]
    %vm46 = vcmask 31744
    %v48 = vsel %vm46, %v44, 0
    %vm50 = vcmask 1043456
    %v52 = vsel %vm50, %v45, 0
    %54 = vmatprep.subr.mxu0 0.0
    %55 = vmatpush1.msra.mxu0 %v52
    %56 = vmatprep.subr.mxu0 0.0
    %57 = vmatpush1.msra.mxu0 0.0
    %58 = vmatprep.subr.mxu0 0.0
    %59 = vmatpush1.msra.mxu0 0.0
    %60 = vmatprep.subr.mxu0 0.0
    %61 = vmatpush1.msra.mxu0 0.0
    %62 = vmatprep.subr.mxu0 0.0
    %63 = vmatpush1.msra.mxu0 0.0
    %64 = vmatprep.subr.mxu0 0.0
    %65 = vmatpush1.msra.mxu0 0.0
    %66 = vmatprep.subr.mxu0 0.0
    %67 = vmatpush1.msra.mxu0 0.0
    %68 = vmatprep.subr.mxu0 0.0
    %69 = vmatpush1.msra.mxu0 0.0
    %70 = vmatprep.subr.mxu0 0.0
    %71 = vmatpush1.msra.mxu0 0.0
    %72 = vmatprep.subr.mxu0 0.0
    %73 = vmatpush1.msra.mxu0 0.0
    %74 = vmatprep.subr.mxu0 0.0
    %75 = vmatpush1.msra.mxu0 0.0
    %76 = vmatprep.subr.mxu0 0.0
    %77 = vmatpush1.msra.mxu0 0.0
    %78 = vmatprep.subr.mxu0 0.0
    %79 = vmatpush1.msra.mxu0 0.0
    %80 = vmatprep.subr.mxu0 0.0
    %81 = vmatpush1.msra.mxu0 0.0
    %82 = vmatprep.subr.mxu0 0.0
    %83 = vmatpush1.msra.mxu0 0.0
    %84 = vmatprep.subr.mxu0 0.0
    %85 = vmatpush1.msra.mxu0 0.0
    %86 = vmatprep.subr.mxu0 0.0
    %87 = vmatpush1.msra.mxu0 0.0
    %88 = vmatprep.subr.mxu0 0.0
    %89 = vmatpush1.msra.mxu0 0.0
    %90 = vmatprep.subr.mxu0 0.0
    %91 = vmatpush1.msra.mxu0 0.0
    %92 = vmatprep.subr.mxu0 0.0
    %93 = vmatpush1.msra.mxu0 0.0
    %94 = vmatprep.subr.mxu0 0.0
    %95 = vmatpush1.msra.mxu0 0.0
    %96 = vmatprep.subr.mxu0 0.0
    %97 = vmatpush1.msra.mxu0 0.0
    %98 = vmatprep.subr.mxu0 0.0
    %99 = vmatpush1.msra.mxu0 0.0
    %100 = vmatprep.subr.mxu0 0.0
    %101 = vmatpush1.msra.mxu0 0.0
    %102 = vmatprep.subr.mxu0 0.0
    %103 = vmatpush1.msra.mxu0 0.0
    %104 = vmatprep.subr.mxu0 0.0
    %105 = vmatpush1.msra.mxu0 0.0
    %106 = vmatprep.subr.mxu0 0.0
    %107 = vmatpush1.msra.mxu0 0.0
    %108 = vmatprep.subr.mxu0 0.0
    %109 = vmatpush1.msra.mxu0 0.0
    %110 = vmatprep.subr.mxu0 0.0
    %111 = vmatpush1.msra.mxu0 0.0
    %112 = vmatprep.subr.mxu0 0.0
    %113 = vmatpush1.msra.mxu0 0.0
    %114 = vmatprep.subr.mxu0 0.0
    %115 = vmatpush1.msra.mxu0 0.0
    %116 = vmatprep.subr.mxu0 0.0
    %117 = vmatpush1.msra.mxu0 0.0
    %118 = vmatprep.mubr.f32.mxu0 0.0
    %119 = vmatmul.mubr.f32.gmra.mrb[0].mxu0 %v48
    %v120 = vpop.f32.mrb[0].mxu0
    %v121 = vadd.f32 0.0, %v120
    %v122 = vpop.f32.mrb[0].mxu0
    %123 = vdwg.mxu0
    %vm124 = vcmask 130048
    %v126 = vsel %vm124, %v41, 0
    %128 = vmatprep.subr.mxu0 0.0
    %129 = vmatpush1.msra.mxu0 %v42
    %130 = vmatprep.subr.mxu0 0.0
    %131 = vmatpush1.msra.mxu0 %v43
    %132 = vmatprep.subr.mxu0 0.0
    %133 = vmatpush1.msra.mxu0 0.0
    %134 = vmatprep.subr.mxu0 0.0
    %135 = vmatpush1.msra.mxu0 0.0
    %136 = vmatprep.subr.mxu0 0.0
    %137 = vmatpush1.msra.mxu0 0.0
    %138 = vmatprep.subr.mxu0 0.0
    %139 = vmatpush1.msra.mxu0 0.0
    %140 = vmatprep.subr.mxu0 0.0
    %141 = vmatpush1.msra.mxu0 0.0
    %142 = vmatprep.subr.mxu0 0.0
    %143 = vmatpush1.msra.mxu0 0.0
    %144 = vmatprep.subr.mxu0 0.0
    %145 = vmatpush1.msra.mxu0 0.0
    %146 = vmatprep.subr.mxu0 0.0
    %147 = vmatpush1.msra.mxu0 0.0
    %148 = vmatprep.subr.mxu0 0.0
    %149 = vmatpush1.msra.mxu0 0.0
    %150 = vmatprep.subr.mxu0 0.0
    %151 = vmatpush1.msra.mxu0 0.0
    %152 = vmatprep.subr.mxu0 0.0
    %153 = vmatpush1.msra.mxu0 0.0
    %154 = vmatprep.subr.mxu0 0.0
    %155 = vmatpush1.msra.mxu0 0.0
    %156 = vmatprep.subr.mxu0 0.0
    %157 = vmatpush1.msra.mxu0 0.0
    %158 = vmatprep.subr.mxu0 0.0
    %159 = vmatpush1.msra.mxu0 0.0
    %160 = vmatprep.subr.mxu0 0.0
    %161 = vmatpush1.msra.mxu0 0.0
    %162 = vmatprep.subr.mxu0 0.0
    %163 = vmatpush1.msra.mxu0 0.0
    %164 = vmatprep.subr.mxu0 0.0
    %165 = vmatpush1.msra.mxu0 0.0
    %166 = vmatprep.subr.mxu0 0.0
    %167 = vmatpush1.msra.mxu0 0.0
    %168 = vmatprep.subr.mxu0 0.0
    %169 = vmatpush1.msra.mxu0 0.0
    %170 = vmatprep.subr.mxu0 0.0
    %171 = vmatpush1.msra.mxu0 0.0
    %172 = vmatprep.subr.mxu0 0.0
    %173 = vmatpush1.msra.mxu0 0.0
    %174 = vmatprep.subr.mxu0 0.0
    %175 = vmatpush1.msra.mxu0 0.0
    %176 = vmatprep.subr.mxu0 0.0
    %177 = vmatpush1.msra.mxu0 0.0
    %178 = vmatprep.subr.mxu0 0.0
    %179 = vmatpush1.msra.mxu0 0.0
    %180 = vmatprep.subr.mxu0 0.0
    %181 = vmatpush1.msra.mxu0 0.0
    %182 = vmatprep.subr.mxu0 0.0
    %183 = vmatpush1.msra.mxu0 0.0
    %184 = vmatprep.subr.mxu0 0.0
    %185 = vmatpush1.msra.mxu0 0.0
    %186 = vmatprep.subr.mxu0 0.0
    %187 = vmatpush1.msra.mxu0 0.0
    %188 = vmatprep.subr.mxu0 0.0
    %189 = vmatpush1.msra.mxu0 0.0
    %190 = vmatprep.subr.mxu0 0.0
    %191 = vmatpush1.msra.mxu0 0.0
    %192 = vmatprep.mubr.f32.mxu0 0.0
    %193 = vmatmul.mubr.f32.gmra.mrb[0].mxu0 %v126
    %v194 = vpop.f32.mrb[0].mxu0
    %v195 = vadd.f32 %v121, %v194
    %v196 = vpop.f32.mrb[0].mxu0
    %197 = vdwg.mxu0
    %v198 = vld [vmem:[%s4] sm:$0x1]
    %v200 = vlaneseq
    %v201 = vshrl.u32 %v200, 7
    %v202 = vsub.s32 0, %v201
    %v203 = vrot.slane %v198, %v202
    %v205 = vadd.f32 %v195, %v203
    %v206 = vmax.f32 %v205, 0.0
    %v207 = vld [vmem:[%s5] sm:$0x1]
    %v208 = vld [vmem:[#allocation2] sm:$0x1]
    %210 = vset.pattern.permute.xlu0 0
    %211 = vperm.xlu0 %210, %v208
    %v212 = vpop.permute.xlu0 %211
    %v214 = vlaneseq
    %v215 = vshrl.u32 %v214, 7
    %v216 = vsub.s32 0, %v215
    %v217 = vrot.slane %v212, %v216
    %vm218 = vcmask 261120
    %v220 = vsel %vm218, %v207, 0
    %v223 = vsel %vm218, %v206, 0
    %225 = vmatprep.subr.mxu0 0.0
    %226 = vmatpush1.xpose.msra.mxu0 %v223
    %227 = vmatprep.subr.mxu0 0.0
    %228 = vmatpush1.xpose.msra.mxu0 0.0
    %229 = vmatprep.subr.mxu0 0.0
    %230 = vmatpush1.xpose.msra.mxu0 0.0
    %231 = vmatprep.subr.mxu0 0.0
    %232 = vmatpush1.xpose.msra.mxu0 0.0
    %233 = vmatprep.subr.mxu0 0.0
    %234 = vmatpush1.xpose.msra.mxu0 0.0
    %235 = vmatprep.subr.mxu0 0.0
    %236 = vmatpush1.xpose.msra.mxu0 0.0
    %237 = vmatprep.subr.mxu0 0.0
    %238 = vmatpush1.xpose.msra.mxu0 0.0
    %239 = vmatprep.subr.mxu0 0.0
    %240 = vmatpush1.xpose.msra.mxu0 0.0
    %241 = vmatprep.subr.mxu0 0.0
    %242 = vmatpush1.xpose.msra.mxu0 0.0
    %243 = vmatprep.subr.mxu0 0.0
    %244 = vmatpush1.xpose.msra.mxu0 0.0
    %245 = vmatprep.subr.mxu0 0.0
    %246 = vmatpush1.xpose.msra.mxu0 0.0
    %247 = vmatprep.subr.mxu0 0.0
    %248 = vmatpush1.xpose.msra.mxu0 0.0
    %249 = vmatprep.subr.mxu0 0.0
    %250 = vmatpush1.xpose.msra.mxu0 0.0
    %251 = vmatprep.subr.mxu0 0.0
    %252 = vmatpush1.xpose.msra.mxu0 0.0
    %253 = vmatprep.subr.mxu0 0.0
    %254 = vmatpush1.xpose.msra.mxu0 0.0
    %255 = vmatprep.subr.mxu0 0.0
    %256 = vmatpush1.xpose.msra.mxu0 0.0
    %257 = vmatprep.subr.mxu0 0.0
    %258 = vmatpush1.xpose.msra.mxu0 0.0
    %259 = vmatprep.subr.mxu0 0.0
    %260 = vmatpush1.xpose.msra.mxu0 0.0
    %261 = vmatprep.subr.mxu0 0.0
    %262 = vmatpush1.xpose.msra.mxu0 0.0
    %263 = vmatprep.subr.mxu0 0.0
    %264 = vmatpush1.xpose.msra.mxu0 0.0
    %265 = vmatprep.subr.mxu0 0.0
    %266 = vmatpush1.xpose.msra.mxu0 0.0
    %267 = vmatprep.subr.mxu0 0.0
    %268 = vmatpush1.xpose.msra.mxu0 0.0
    %269 = vmatprep.subr.mxu0 0.0
    %270 = vmatpush1.xpose.msra.mxu0 0.0
    %271 = vmatprep.subr.mxu0 0.0
    %272 = vmatpush1.xpose.msra.mxu0 0.0
    %273 = vmatprep.subr.mxu0 0.0
    %274 = vmatpush1.xpose.msra.mxu0 0.0
    %275 = vmatprep.subr.mxu0 0.0
    %276 = vmatpush1.xpose.msra.mxu0 0.0
    %277 = vmatprep.subr.mxu0 0.0
    %278 = vmatpush1.xpose.msra.mxu0 0.0
    %279 = vmatprep.subr.mxu0 0.0
    %280 = vmatpush1.xpose.msra.mxu0 0.0
    %281 = vmatprep.subr.mxu0 0.0
    %282 = vmatpush1.xpose.msra.mxu0 0.0
    %283 = vmatprep.subr.mxu0 0.0
    %284 = vmatpush1.xpose.msra.mxu0 0.0
    %285 = vmatprep.subr.mxu0 0.0
    %286 = vmatpush1.xpose.msra.mxu0 0.0
    %287 = vmatprep.subr.mxu0 0.0
    %288 = vmatpush1.xpose.msra.mxu0 0.0
    %289 = vmatprep.mubr.f32.mxu0 0.0
    %290 = vmatmul.mubr.f32.gmra.mrb[0].mxu0 %v220
    %v291 = vpop.f32.mrb[0].mxu0
    %v292 = vadd.f32 %v217, %v291
    %v293 = vpop.f32.mrb[0].mxu0
    %294 = vdwg.mxu0
    %v295 = vsub.f32 0.0, %v292
    %v296 = vmul.f32 %v295, 1.442695
    %v297 = vpow.pop %v296
    %v298 = vadd.f32 %v297, 1.0
    %v299 = vrcp.pop %v298
    %vm300 = vcmask 57344
    %301 = vst.msk [vmem:[#allocation6] sm:$0x1] %vm300, %v299
    // Predicated region
    $region34: #{tpu_custom_call.1} parent=1 // pred_check
      _
    $region35: #{tpu_custom_call.1} parent=1 // pred_check_branch
      %303 = sbr.rel (0) target = $region37
    $region36: #{tpu_custom_call.1} parent=1 // pred_region
      %s305 = ssub.s32 16, 16
      %306 = vsyncadd [#allocation5], %s305
      %s308 = sshll.u32 [#allocation6], 4
      %s309 = int_to_ptr.vmem [resolvable:$true] %s308
      %311 = dma.vmem_to_hbm [thread:$0]  %s309, 16, %s7, [#allocation5]
    $region37: #{tpu_custom_call.1} parent=1 // pred_fallthru
      _
    // Predicated region
    $region38: #{tpu_custom_call.1} parent=1 // pred_check
      _
    $region39: #{tpu_custom_call.1} parent=1 // pred_check_branch
      %313 = sbr.rel (0) target = $region41
    $region40: #{tpu_custom_call.1} parent=1 // pred_region
      %314 = dma.done [#allocation5], 16
    $region41: #{tpu_custom_call.1} parent=1 // pred_fallthru
      _
    %315 = vsyncpa [#allocation4], 1
    %316 = vsyncpa [#allocation5], 1

</llo_original>
